<compile_context>
chip_gen: v6e
topology: v6e:2x2x1
jax: 0.10.0
libtpu: 0.0.40
codegen_flags: <defaults>
</compile_context>

<pallas_src>
import jax
import jax.numpy as jnp
from jax import lax
from jax.experimental import pallas as pl
from jax.experimental.pallas import tpu as pltpu


def _mlp_kernel(x_ref, w1_ref, w2_ref, y_ref):
    # h = x @ W1^T : contract dim 1 of x with dim 1 of the (out, in) weight.
    # dot_general lets Mosaic issue a transposed-RHS MXU matmul directly; no
    # relayout / XLU transpose of the weight tile.
    h = lax.dot_general(
        x_ref[...],
        w1_ref[...],
        dimension_numbers=(((1,), (1,)), ((), ())),
        preferred_element_type=jnp.float32,
    )
    # y = h @ W2^T, same contraction pattern; cast h back to the compute dtype
    # so the second matmul also runs on the fast (bf16) MXU path.
    y = lax.dot_general(
        h.astype(w2_ref.dtype),
        w2_ref[...],
        dimension_numbers=(((1,), (1,)), ((), ())),
        preferred_element_type=jnp.float32,
    )
    y_ref[...] = y.astype(y_ref.dtype)


def _pick_batch_tile(B):
    # Largest power-of-two tile (<=512 rows) that divides B; fall back to a
    # single full-extent block for ragged tiny batches (always legal).
    for tb in (512, 256, 128, 64, 32, 16, 8):
        if B % tb == 0:
            return tb
    return B


def net_forward(x, w1, w2, compute_dtype=jnp.bfloat16):
    """x: (B, vdim); w1: (vector_dim, vdim); w2: (vdim, vector_dim).

    Returns (B, vdim) in x.dtype. Matmuls run in `compute_dtype` (bf16 by
    default) with f32 accumulation; pass compute_dtype=jnp.float32 for a
    bit-exact f32 path.
    """
    B, vdim = x.shape
    vector_dim = w1.shape[0]
    assert w1.shape == (vector_dim, vdim)
    assert w2.shape == (vdim, vector_dim)
    # Lane-dense outputs (unmasked vst) and MXU-friendly contraction dims.
    assert vdim % 128 == 0 and vector_dim % 128 == 0, (
        "pad vdim / vector_dim to multiples of 128 for lane-dense MXU tiles")

    out_dtype = x.dtype
    xc = x.astype(compute_dtype)
    w1c = w1.astype(compute_dtype)
    w2c = w2.astype(compute_dtype)

    tb = _pick_batch_tile(B)
    grid = (B // tb,)

    # --- VMEM budgeting -----------------------------------------------------
    isz = jnp.dtype(compute_dtype).itemsize
    osz = jnp.dtype(out_dtype).itemsize
    w_bytes = (w1c.size + w2c.size) * isz
    x_tile_bytes = tb * vdim * isz
    y_tile_bytes = tb * vdim * osz
    h_bytes = tb * vector_dim * 4
    # Every BlockSpec operand is double-buffered; h is a compute temporary.
    vmem_need = 2 * (w_bytes + x_tile_bytes + y_tile_bytes) + 2 * h_bytes
    vmem_limit = None
    if vmem_need > 12 * 1024 * 1024:
        # Stay under v7x's 64 MiB physical VMEM; default scoped limits are
        # 16 MiB (v5e) / 32 MiB (v6e, v7x).
        vmem_limit = int(min(max(2 * vmem_need, 16 * 1024 * 1024),
                             48 * 1024 * 1024))
    # TODO(synk): if the resident weights alone exceed ~40 MiB, switch to a
    # K-tiled grid (reduction axis last, f32 VMEM accumulator, pl.when
    # init/finalize) instead of keeping both weights resident.

    cost = pl.CostEstimate(
        flops=4 * B * vdim * vector_dim,           # two matmuls, 2*B*d1*d2 each
        transcendentals=0,
        bytes_accessed=(xc.size * isz + w1c.size * isz + w2c.size * isz
                        + B * vdim * osz),
    )

    return pl.pallas_call(
        _mlp_kernel,
        out_shape=jax.ShapeDtypeStruct((B, vdim), out_dtype),
        grid_spec=pltpu.PrefetchScalarGridSpec(
            num_scalar_prefetch=0,
            grid=grid,
            in_specs=[
                pl.BlockSpec((tb, vdim), lambda i: (i, 0)),           # x: batch-tiled
                pl.BlockSpec((vector_dim, vdim), lambda i: (0, 0)),   # W1 resident
                pl.BlockSpec((vdim, vector_dim), lambda i: (0, 0)),   # W2 resident
            ],
            out_specs=pl.BlockSpec((tb, vdim), lambda i: (i, 0)),
        ),
        compiler_params=pltpu.CompilerParams(
            dimension_semantics=("parallel",),   # shards batch across TCs on v7x
            vmem_limit_bytes=vmem_limit,
        ),
        cost_estimate=cost,
    )(xc, w1c, w2c)


if __name__ == "__main__":
    # Small, TPU-tile-friendly shapes consistent with the module.
    B, vdim, vector_dim = 1024, 256, 128

    key = jax.random.PRNGKey(0)
    kx, k1, k2 = jax.random.split(key, 3)

    # PyTorch Linear default init: U(-1/sqrt(fan_in), +1/sqrt(fan_in)).
    bound1 = 1.0 / (vdim ** 0.5)
    bound2 = 1.0 / (vector_dim ** 0.5)
    w1 = jax.random.uniform(k1, (vector_dim, vdim), jnp.float32, -bound1, bound1)
    w2 = jax.random.uniform(k2, (vdim, vector_dim), jnp.float32, -bound2, bound2)
    x = jax.random.normal(kx, (B, vdim), jnp.float32)

    y = jax.block_until_ready(jax.jit(net_forward)(x, w1, w2))

    # Reference along the same bf16-compute / f32-accumulate path.
    xb, w1b, w2b = (a.astype(jnp.bfloat16) for a in (x, w1, w2))
    h_ref = jnp.dot(xb, w1b.T, preferred_element_type=jnp.float32)
    y_ref = jnp.dot(h_ref.astype(jnp.bfloat16), w2b.T,
                    preferred_element_type=jnp.float32)

    assert y.shape == (B, vdim) and y.dtype == x.dtype
    assert jnp.allclose(y, y_ref, atol=2e-2, rtol=2e-2)
    # Loose sanity check against full-f32 math (bf16 input rounding only).
    y_f32 = (x @ w1.T) @ w2.T
    assert jnp.allclose(y, y_f32, atol=1e-1, rtol=1e-1)

    print("KERNEL_OK")
</pallas_src>

<mosaic_0001>
module attributes {stable_mosaic.version = 11 : i64} {
  func.func @_mlp_kernel(%arg0: i32, %arg1: memref<512x256xbf16, #tpu.memory_space<vmem>>, %arg2: memref<128x256xbf16, #tpu.memory_space<vmem>>, %arg3: memref<256x128xbf16, #tpu.memory_space<vmem>>, %arg4: memref<512x256xf32, #tpu.memory_space<vmem>>) attributes {dimension_semantics = [#tpu.dimension_semantics<parallel>], iteration_bounds = array<i64: 2>, scalar_prefetch = 0 : i64, scratch_operands = 0 : i64, tpu.core_type = #tpu.core_type<tc>, window_params = [{transform_indices = @transform_0, window_bounds = array<i64: 512, 256>}, {pipeline_mode = #tpu.pipeline_mode<synchronous>, transform_indices = @transform_1, window_bounds = array<i64: 128, 256>}, {pipeline_mode = #tpu.pipeline_mode<synchronous>, transform_indices = @transform_2, window_bounds = array<i64: 256, 128>}, {transform_indices = @transform_3, window_bounds = array<i64: 512, 256>}]} {
    %c0 = arith.constant 0 : index
    %c0_0 = arith.constant 0 : index
    %0 = vector.load %arg1[%c0, %c0_0] : memref<512x256xbf16, #tpu.memory_space<vmem>>, vector<512x256xbf16>
    %c0_1 = arith.constant 0 : index
    %c0_2 = arith.constant 0 : index
    %1 = vector.load %arg2[%c0_1, %c0_2] : memref<128x256xbf16, #tpu.memory_space<vmem>>, vector<128x256xbf16>
    %cst = arith.constant dense<0.000000e+00> : vector<512x128xf32>
    %2 = tpu.matmul %0, %1, %cst {dimension_numbers = #tpu.dot_dimension_numbers<[1], [1], [0], [0], [0, 0, 1, 0], [], []>} : vector<512x256xbf16>, vector<128x256xbf16>, vector<512x128xf32> -> vector<512x128xf32>
    %3 = arith.truncf %2 : vector<512x128xf32> to vector<512x128xbf16>
    %c0_3 = arith.constant 0 : index
    %c0_4 = arith.constant 0 : index
    %4 = vector.load %arg3[%c0_3, %c0_4] : memref<256x128xbf16, #tpu.memory_space<vmem>>, vector<256x128xbf16>
    %cst_5 = arith.constant dense<0.000000e+00> : vector<512x256xf32>
    %5 = tpu.matmul %3, %4, %cst_5 {dimension_numbers = #tpu.dot_dimension_numbers<[1], [1], [0], [0], [0, 0, 1, 0], [], []>} : vector<512x128xbf16>, vector<256x128xbf16>, vector<512x256xf32> -> vector<512x256xf32>
    %c0_6 = arith.constant 0 : index
    %c0_7 = arith.constant 0 : index
    %6 = vector.load %arg4[%c0_6, %c0_7] : memref<512x256xf32, #tpu.memory_space<vmem>>, vector<512x256xf32>
    tpu.vector_store %arg4[%c0_6, %c0_7], %5 {strides = array<i32>} : memref<512x256xf32, #tpu.memory_space<vmem>>, vector<512x256xf32>,
    return
  }
  func.func @transform_0(%arg0: i32) -> (i32, i32) {
    %c0_i32 = arith.constant 0 : i32
    %c0_i32_0 = arith.constant 0 : i32
    return %arg0, %c0_i32 : i32, i32
  }
  func.func @transform_1(%arg0: i32) -> (i32, i32) {
    %c0_i32 = arith.constant 0 : i32
    %c0_i32_0 = arith.constant 0 : i32
    %c0_i32_1 = arith.constant 0 : i32
    return %c0_i32, %c0_i32_0 : i32, i32
  }
  func.func @transform_2(%arg0: i32) -> (i32, i32) {
    %c0_i32 = arith.constant 0 : i32
    %c0_i32_0 = arith.constant 0 : i32
    %c0_i32_1 = arith.constant 0 : i32
    return %c0_i32, %c0_i32_0 : i32, i32
  }
  func.func @transform_3(%arg0: i32) -> (i32, i32) {
    %c0_i32 = arith.constant 0 : i32
    %c0_i32_0 = arith.constant 0 : i32
    return %arg0, %c0_i32 : i32, i32
  }
}

</mosaic_0001>

<llo_original>
// kernel: net_forward.1
$region0: #{net_forward.1}
  #allocation0 [shape = 'u32[]', space=smem, size = 0x4, offset = 0x4, fixed_abs, tag = 'smem constant byte address 0x4 - core index']
  #allocation1 [shape = 'u32[144,128]{1,0:T(1,128)}', space=vmem, size = 0x12000, scoped, tag = 'internal scratch']
  %s0 = inlined_call_operand.vmem [shape: bf16[1024,256], index: 0, kind: input, shape index: {}]
  %s1 = inlined_call_operand.vmem [shape: bf16[128,256], index: 1, kind: input, shape index: {}]
  %s2 = inlined_call_operand.vmem [shape: bf16[256,128], index: 2, kind: input, shape index: {}]
  %s3 = inlined_call_operand.hbm [shape: f32[1024,256], index: 3, kind: output, shape index: {}]
  %s4 = sld [smem:[#allocation0]]
  $region45: #{net_forward.1} parent=0
    _
  %s6 = ssub.s32 1, %s4
  %s7 = scalar_select 0, %s6, %s4
  $region1: #{net_forward.1} parent=0
    #allocation2 [shape = 'u8[1048576]{0}', space=vmem, size = 0x100000, scoped, tag = 'output window, operand 0']
    #allocation3 [shape = 's32[2]{0}', space=sflag, size = 0x8, scoped, tag = 'scoped memory for net_forward.1']
    %8 = vsyncpa [#allocation3], 0
    %s9 = scalar_lea.sflag [#allocation3], 1
    %10 = vsyncpa %s9, 0
    loop: start=0, step=1, limit=4
    $region2: #{net_forward.1} parent=1 // loop_pre_header
      _
    $region3: #{net_forward.1} parent=1 // loop_header
      %s12 = sphi 0, %s16
      %p13 = scmp.ge.s32.totalorder %s12, 4
      %s22 = sphi 0, %s24
      %s25 = sphi 0, %s22
      %s26 = sphi 0, %s25
      %s42 = sphi 0, %s26
      %s46 = sphi 0, %s46
      %s48 = sphi 0, %s46
      %s49 = sphi 0, %s48
      %s63 = sphi 0, %s49
      %s67 = sphi 0, %s67
      %s69 = sphi 0, %s67
      %s70 = sphi 0, %s69
      %s84 = sphi 0, %s70
      %s90 = sphi 0, %s92
      %s93 = sphi 0, %s90
      %s94 = sphi 0, %s93
      %s110 = sphi 0, %s94
    $region4: #{net_forward.1} parent=1 // loop_header_branch
      %15 = sbr.rel (%p13) target = $region8
    $region5: #{net_forward.1} parent=1 // loop_body
      %s17 = ssub.s32 %s12, 1
      %s18 = ssub.s32 %s12, 2
      %s19 = sadd.s32 %s12, 1
      %s20 = ssub.s32 %s12, %s19
      %p21 = scmp.eq.s32.totalorder %s20, 0
      %s23 = sadd.s32 %s22, 1
      %s24 = scalar_select %p21, %s22, %s23
      %p27 = pneg %p21
      %p28 = scmp.eq.s32.totalorder %s12, 1
      %p29 = por %p27, %p28
      %p30 = scmp.ne.s32.totalorder %s22, %s25
      %p31 = scmp.eq.s32.totalorder %s12, 0
      %p32 = por %p30, %p31
      %p33 = scmp.ne.s32.totalorder %s22, %s25
      %p34 = scmp.eq.s32.totalorder %s17, 1
      %p35 = por %p33, %p34
      %p36 = scmp.ne.s32.totalorder %s25, %s26
      %p37 = scmp.eq.s32.totalorder %s17, 0
      %p38 = por %p36, %p37
      %p39 = scmp.ne.s32.totalorder %s25, %s26
      %p40 = scmp.eq.s32.totalorder %s18, 1
      %p41 = por %p39, %p40
      %p43 = scmp.ne.s32.totalorder %s26, %s42
      %p44 = scmp.eq.s32.totalorder %s18, 0
      %p45 = por %p43, %p44
      %s47 = sadd.s32 %s46, 1
      %p50 = scmp.eq.s32.totalorder %s12, 1
      %p51 = scmp.ne.s32.totalorder %s46, %s48
      %p52 = scmp.eq.s32.totalorder %s12, 0
      %p53 = por %p51, %p52
      %p54 = scmp.ne.s32.totalorder %s46, %s48
      %p55 = scmp.eq.s32.totalorder %s17, 1
      %p56 = por %p54, %p55
      %p57 = scmp.ne.s32.totalorder %s48, %s49
      %p58 = scmp.eq.s32.totalorder %s17, 0
      %p59 = por %p57, %p58
      %p60 = scmp.ne.s32.totalorder %s48, %s49
      %p61 = scmp.eq.s32.totalorder %s18, 1
      %p62 = por %p60, %p61
      %p64 = scmp.ne.s32.totalorder %s49, %s63
      %p65 = scmp.eq.s32.totalorder %s18, 0
      %p66 = por %p64, %p65
      %s68 = sadd.s32 %s67, 1
      %p71 = scmp.eq.s32.totalorder %s12, 1
      %p72 = scmp.ne.s32.totalorder %s67, %s69
      %p73 = scmp.eq.s32.totalorder %s12, 0
      %p74 = por %p72, %p73
      %p75 = scmp.ne.s32.totalorder %s67, %s69
      %p76 = scmp.eq.s32.totalorder %s17, 1
      %p77 = por %p75, %p76
      %p78 = scmp.ne.s32.totalorder %s69, %s70
      %p79 = scmp.eq.s32.totalorder %s17, 0
      %p80 = por %p78, %p79
      %p81 = scmp.ne.s32.totalorder %s69, %s70
      %p82 = scmp.eq.s32.totalorder %s18, 1
      %p83 = por %p81, %p82
      %p85 = scmp.ne.s32.totalorder %s70, %s84
      %p86 = scmp.eq.s32.totalorder %s18, 0
      %p87 = por %p85, %p86
      %s88 = ssub.s32 %s12, %s19
      %p89 = scmp.eq.s32.totalorder %s88, 0
      %s91 = sadd.s32 %s90, 1
      %s92 = scalar_select %p89, %s90, %s91
      %p95 = pneg %p89
      %p96 = scmp.eq.s32.totalorder %s12, 1
      %p97 = por %p95, %p96
      %p98 = scmp.ne.s32.totalorder %s90, %s93
      %p99 = scmp.eq.s32.totalorder %s12, 0
      %p100 = por %p98, %p99
      %p101 = scmp.ne.s32.totalorder %s90, %s93
      %p102 = scmp.eq.s32.totalorder %s17, 1
      %p103 = por %p101, %p102
      %p104 = scmp.ne.s32.totalorder %s93, %s94
      %p105 = scmp.eq.s32.totalorder %s17, 0
      %p106 = por %p104, %p105
      %p107 = scmp.ne.s32.totalorder %s93, %s94
      %p108 = scmp.eq.s32.totalorder %s18, 1
      %p109 = por %p107, %p108
      %p111 = scmp.ne.s32.totalorder %s94, %s110
      %p112 = scmp.eq.s32.totalorder %s18, 0
      %p113 = por %p111, %p112
      %p114 = scmp.le.s32.totalorder 1, %s12
      %p115 = scmp.lt.s32.totalorder %s12, 3
      %p116 = pnand %p114, %p115
      %p117 = pneg %p116
      // Predicated region
      $region9: #{net_forward.1} parent=5 // pred_check
        _
      $region10: #{net_forward.1} parent=5 // pred_check_branch
        %119 = sbr.rel (%p116) target = $region12
      $region11: #{net_forward.1} parent=5 // pred_region
        %s120 = ssub.s32 %s12, 1
        // Predicated region
        $region13: #{net_forward.1} parent=11 // pred_check
          %p121 = pneg %p59
        $region14: #{net_forward.1} parent=11 // pred_check_branch
          %123 = sbr.rel (%p121) target = $region16
        $region15: #{net_forward.1} parent=11 // pred_region
          _
        $region16: #{net_forward.1} parent=11 // pred_fallthru
          _
        // Predicated region
        $region17: #{net_forward.1} parent=11 // pred_check
          %p124 = pneg %p80
        $region18: #{net_forward.1} parent=11 // pred_check_branch
          %126 = sbr.rel (%p124) target = $region20
        $region19: #{net_forward.1} parent=11 // pred_region
          _
        $region20: #{net_forward.1} parent=11 // pred_fallthru
          _
      $region12: #{net_forward.1} parent=5 // pred_fallthru
        _
      %p127 = scmp.lt.s32.totalorder %s12, 2
      // Predicated region
      $region21: #{net_forward.1} parent=5 // pred_check
        %p128 = pneg %p127
      $region22: #{net_forward.1} parent=5 // pred_check_branch
        %130 = sbr.rel (%p128) target = $region24
      $region23: #{net_forward.1} parent=5 // pred_region
        // Predicated region
        $region25: #{net_forward.1} parent=23 // pred_check
          %p131 = pneg %p32
        $region26: #{net_forward.1} parent=23 // pred_check_branch
          %133 = sbr.rel (%p131) target = $region28
        $region27: #{net_forward.1} parent=23 // pred_region
          %s134 = smul.u32 64, %s12
          %p135 = scmp.lt.s32.totalorder %s134, 127
          %s136 = scalar_select %p135, %s134, 127
          %s137 = smul.addr %s136, 2
          %s138 = smul.addr %s137, 4
          %s139 = scalar_lea.vmem %s0, %s138
          %s140 = smul.u32 64, %s12
        $region28: #{net_forward.1} parent=23 // pred_fallthru
          _
      $region24: #{net_forward.1} parent=5 // pred_fallthru
        _
      %p141 = scmp.le.s32.totalorder 1, %s12
      %p142 = scmp.lt.s32.totalorder %s12, 3
      %p143 = pnand %p141, %p142
      %p144 = pneg %p143
      // Predicated region
      $region29: #{net_forward.1} parent=5 // pred_check
        _
      $region30: #{net_forward.1} parent=5 // pred_check_branch
        %146 = sbr.rel (%p143) target = $region32
      $region31: #{net_forward.1} parent=5 // pred_region
        %s147 = ssub.s32 %s12, 1
        %s148 = smul.u32 64, %s17
        %p149 = scmp.lt.s32.totalorder %s148, 127
        %s150 = scalar_select %p149, %s148, 127
        %s151 = smul.addr %s150, 2
        %s152 = smul.addr %s151, 4
        %s153 = scalar_lea.vmem %s0, %s152
        %p154 = pneg %p38
        %p155 = pneg %p35
        %p156 = pneg %p59
        %p157 = pneg %p56
        %p158 = pneg %p80
        %p159 = pneg %p77
        %p160 = pneg %p106
        %p161 = pneg %p103
        %s162 = sand.u32 %s93, 1
        %s163 = scalar_lea.sflag [#allocation3], %s162
        %s164 = sand.u32 %s93, 1
        %s165 = smul.addr %s164, 1024
        %s166 = scalar_lea.vmem [#allocation2], %s165
        %s167 = smul.u32 64, %s17
        %p168 = scmp.lt.s32.totalorder %s167, 127
        %s169 = scalar_select %p168, %s167, 127
        %s170 = smul.addr %s169, 2
        %s171 = smul.addr %s170, 4
        %s172 = scalar_lea.vmem %s0, %s171
        %s173 = smul.u32 64, %s17
        %s174 = smul.u32 64, %s17
        %v176 = vld [vmem:[%s172] sm:$0xff]
        %v177 = vld [vmem:[%s172 + $0x8] sm:$0xff]
        %v178 = vld [vmem:[%s172 + $0x10] sm:$0xff]
        %v179 = vld [vmem:[%s172 + $0x18] sm:$0xff]
        %v180 = vld [vmem:[%s172 + $0x20] sm:$0xff]
        %v181 = vld [vmem:[%s172 + $0x28] sm:$0xff]
        %v182 = vld [vmem:[%s172 + $0x30] sm:$0xff]
        %v183 = vld [vmem:[%s172 + $0x38] sm:$0xff]
        %v184 = vld [vmem:[%s172 + $0x40] sm:$0xff]
        %v185 = vld [vmem:[%s172 + $0x48] sm:$0xff]
        %v186 = vld [vmem:[%s172 + $0x50] sm:$0xff]
        %v187 = vld [vmem:[%s172 + $0x58] sm:$0xff]
        %v188 = vld [vmem:[%s172 + $0x60] sm:$0xff]
        %v189 = vld [vmem:[%s172 + $0x68] sm:$0xff]
        %v190 = vld [vmem:[%s172 + $0x70] sm:$0xff]
        %v191 = vld [vmem:[%s172 + $0x78] sm:$0xff]
        %v192 = vld [vmem:[%s172 + $0x80] sm:$0xff]
        %v193 = vld [vmem:[%s172 + $0x88] sm:$0xff]
        %v194 = vld [vmem:[%s172 + $0x90] sm:$0xff]
        %v195 = vld [vmem:[%s172 + $0x98] sm:$0xff]
        %v196 = vld [vmem:[%s172 + $0xa0] sm:$0xff]
        %v197 = vld [vmem:[%s172 + $0xa8] sm:$0xff]
        %v198 = vld [vmem:[%s172 + $0xb0] sm:$0xff]
        %v199 = vld [vmem:[%s172 + $0xb8] sm:$0xff]
        %v200 = vld [vmem:[%s172 + $0xc0] sm:$0xff]
        %v201 = vld [vmem:[%s172 + $0xc8] sm:$0xff]
        %v202 = vld [vmem:[%s172 + $0xd0] sm:$0xff]
        %v203 = vld [vmem:[%s172 + $0xd8] sm:$0xff]
        %v204 = vld [vmem:[%s172 + $0xe0] sm:$0xff]
        %v205 = vld [vmem:[%s172 + $0xe8] sm:$0xff]
        %v206 = vld [vmem:[%s172 + $0xf0] sm:$0xff]
        %v207 = vld [vmem:[%s172 + $0xf8] sm:$0xff]
        %v208 = vld [vmem:[%s172 + $0x100] sm:$0xff]
        %v209 = vld [vmem:[%s172 + $0x108] sm:$0xff]
        %v210 = vld [vmem:[%s172 + $0x110] sm:$0xff]
        %v211 = vld [vmem:[%s172 + $0x118] sm:$0xff]
        %v212 = vld [vmem:[%s172 + $0x120] sm:$0xff]
        %v213 = vld [vmem:[%s172 + $0x128] sm:$0xff]
        %v214 = vld [vmem:[%s172 + $0x130] sm:$0xff]
        %v215 = vld [vmem:[%s172 + $0x138] sm:$0xff]
        %v216 = vld [vmem:[%s172 + $0x140] sm:$0xff]
        %v217 = vld [vmem:[%s172 + $0x148] sm:$0xff]
        %v218 = vld [vmem:[%s172 + $0x150] sm:$0xff]
        %v219 = vld [vmem:[%s172 + $0x158] sm:$0xff]
        %v220 = vld [vmem:[%s172 + $0x160] sm:$0xff]
        %v221 = vld [vmem:[%s172 + $0x168] sm:$0xff]
        %v222 = vld [vmem:[%s172 + $0x170] sm:$0xff]
        %v223 = vld [vmem:[%s172 + $0x178] sm:$0xff]
        %v224 = vld [vmem:[%s172 + $0x180] sm:$0xff]
        %v225 = vld [vmem:[%s172 + $0x188] sm:$0xff]
        %v226 = vld [vmem:[%s172 + $0x190] sm:$0xff]
        %v227 = vld [vmem:[%s172 + $0x198] sm:$0xff]
        %v228 = vld [vmem:[%s172 + $0x1a0] sm:$0xff]
        %v229 = vld [vmem:[%s172 + $0x1a8] sm:$0xff]
        %v230 = vld [vmem:[%s172 + $0x1b0] sm:$0xff]
        %v231 = vld [vmem:[%s172 + $0x1b8] sm:$0xff]
        %v232 = vld [vmem:[%s172 + $0x1c0] sm:$0xff]
        %v233 = vld [vmem:[%s172 + $0x1c8] sm:$0xff]
        %v234 = vld [vmem:[%s172 + $0x1d0] sm:$0xff]
        %v235 = vld [vmem:[%s172 + $0x1d8] sm:$0xff]
        %v236 = vld [vmem:[%s172 + $0x1e0] sm:$0xff]
        %v237 = vld [vmem:[%s172 + $0x1e8] sm:$0xff]
        %v238 = vld [vmem:[%s172 + $0x1f0] sm:$0xff]
        %v239 = vld [vmem:[%s172 + $0x1f8] sm:$0xff]
        %v240 = vld [vmem:[%s1] sm:$0xff]
        %v241 = vld [vmem:[%s1 + $0x8] sm:$0xff]
        %v242 = vld [vmem:[%s1 + $0x10] sm:$0xff]
        %v243 = vld [vmem:[%s1 + $0x18] sm:$0xff]
        %v244 = vld [vmem:[%s1 + $0x20] sm:$0xff]
        %v245 = vld [vmem:[%s1 + $0x28] sm:$0xff]
        %v246 = vld [vmem:[%s1 + $0x30] sm:$0xff]
        %v247 = vld [vmem:[%s1 + $0x38] sm:$0xff]
        %v248 = vld [vmem:[%s1 + $0x40] sm:$0xff]
        %v249 = vld [vmem:[%s1 + $0x48] sm:$0xff]
        %v250 = vld [vmem:[%s1 + $0x50] sm:$0xff]
        %v251 = vld [vmem:[%s1 + $0x58] sm:$0xff]
        %v252 = vld [vmem:[%s1 + $0x60] sm:$0xff]
        %v253 = vld [vmem:[%s1 + $0x68] sm:$0xff]
        %v254 = vld [vmem:[%s1 + $0x70] sm:$0xff]
        %v255 = vld [vmem:[%s1 + $0x78] sm:$0xff]
        %v320 = vunpack.c.l.b16 %v176
        %v321 = vunpack.c.h.b16 %v176
        %v322 = vunpack.c.l.b16 %v177
        %v323 = vunpack.c.h.b16 %v177
        %v324 = vunpack.c.l.b16 %v178
        %v325 = vunpack.c.h.b16 %v178
        %v326 = vunpack.c.l.b16 %v179
        %v327 = vunpack.c.h.b16 %v179
        %v328 = vunpack.c.l.b16 %v180
        %v329 = vunpack.c.h.b16 %v180
        %v330 = vunpack.c.l.b16 %v181
        %v331 = vunpack.c.h.b16 %v181
        %v332 = vunpack.c.l.b16 %v182
        %v333 = vunpack.c.h.b16 %v182
        %v334 = vunpack.c.l.b16 %v183
        %v335 = vunpack.c.h.b16 %v183
        %v336 = vunpack.c.l.b16 %v184
        %v337 = vunpack.c.h.b16 %v184
        %v338 = vunpack.c.l.b16 %v185
        %v339 = vunpack.c.h.b16 %v185
        %v340 = vunpack.c.l.b16 %v186
        %v341 = vunpack.c.h.b16 %v186
        %v342 = vunpack.c.l.b16 %v187
        %v343 = vunpack.c.h.b16 %v187
        %v344 = vunpack.c.l.b16 %v188
        %v345 = vunpack.c.h.b16 %v188
        %v346 = vunpack.c.l.b16 %v189
        %v347 = vunpack.c.h.b16 %v189
        %v348 = vunpack.c.l.b16 %v190
        %v349 = vunpack.c.h.b16 %v190
        %v350 = vunpack.c.l.b16 %v191
        %v351 = vunpack.c.h.b16 %v191
        %v352 = vunpack.c.l.b16 %v192
        %v353 = vunpack.c.h.b16 %v192
        %v354 = vunpack.c.l.b16 %v193
        %v355 = vunpack.c.h.b16 %v193
        %v356 = vunpack.c.l.b16 %v194
        %v357 = vunpack.c.h.b16 %v194
        %v358 = vunpack.c.l.b16 %v195
        %v359 = vunpack.c.h.b16 %v195
        %v360 = vunpack.c.l.b16 %v196
        %v361 = vunpack.c.h.b16 %v196
        %v362 = vunpack.c.l.b16 %v197
        %v363 = vunpack.c.h.b16 %v197
        %v364 = vunpack.c.l.b16 %v198
        %v365 = vunpack.c.h.b16 %v198
        %v366 = vunpack.c.l.b16 %v199
        %v367 = vunpack.c.h.b16 %v199
        %v368 = vunpack.c.l.b16 %v200
        %v369 = vunpack.c.h.b16 %v200
        %v370 = vunpack.c.l.b16 %v201
        %v371 = vunpack.c.h.b16 %v201
        %v372 = vunpack.c.l.b16 %v202
        %v373 = vunpack.c.h.b16 %v202
        %v374 = vunpack.c.l.b16 %v203
        %v375 = vunpack.c.h.b16 %v203
        %v376 = vunpack.c.l.b16 %v204
        %v377 = vunpack.c.h.b16 %v204
        %v378 = vunpack.c.l.b16 %v205
        %v379 = vunpack.c.h.b16 %v205
        %v380 = vunpack.c.l.b16 %v206
        %v381 = vunpack.c.h.b16 %v206
        %v382 = vunpack.c.l.b16 %v207
        %v383 = vunpack.c.h.b16 %v207
        %v384 = vunpack.c.l.b16 %v208
        %v385 = vunpack.c.h.b16 %v208
        %v386 = vunpack.c.l.b16 %v209
        %v387 = vunpack.c.h.b16 %v209
        %v388 = vunpack.c.l.b16 %v210
        %v389 = vunpack.c.h.b16 %v210
        %v390 = vunpack.c.l.b16 %v211
        %v391 = vunpack.c.h.b16 %v211
        %v392 = vunpack.c.l.b16 %v212
        %v393 = vunpack.c.h.b16 %v212
        %v394 = vunpack.c.l.b16 %v213
        %v395 = vunpack.c.h.b16 %v213
        %v396 = vunpack.c.l.b16 %v214
        %v397 = vunpack.c.h.b16 %v214
        %v398 = vunpack.c.l.b16 %v215
        %v399 = vunpack.c.h.b16 %v215
        %v400 = vunpack.c.l.b16 %v216
        %v401 = vunpack.c.h.b16 %v216
        %v402 = vunpack.c.l.b16 %v217
        %v403 = vunpack.c.h.b16 %v217
        %v404 = vunpack.c.l.b16 %v218
        %v405 = vunpack.c.h.b16 %v218
        %v406 = vunpack.c.l.b16 %v219
        %v407 = vunpack.c.h.b16 %v219
        %v408 = vunpack.c.l.b16 %v220
        %v409 = vunpack.c.h.b16 %v220
        %v410 = vunpack.c.l.b16 %v221
        %v411 = vunpack.c.h.b16 %v221
        %v412 = vunpack.c.l.b16 %v222
        %v413 = vunpack.c.h.b16 %v222
        %v414 = vunpack.c.l.b16 %v223
        %v415 = vunpack.c.h.b16 %v223
        %v416 = vunpack.c.l.b16 %v224
        %v417 = vunpack.c.h.b16 %v224
        %v418 = vunpack.c.l.b16 %v225
        %v419 = vunpack.c.h.b16 %v225
        %v420 = vunpack.c.l.b16 %v226
        %v421 = vunpack.c.h.b16 %v226
        %v422 = vunpack.c.l.b16 %v227
        %v423 = vunpack.c.h.b16 %v227
        %v424 = vunpack.c.l.b16 %v228
        %v425 = vunpack.c.h.b16 %v228
        %v426 = vunpack.c.l.b16 %v229
        %v427 = vunpack.c.h.b16 %v229
        %v428 = vunpack.c.l.b16 %v230
        %v429 = vunpack.c.h.b16 %v230
        %v430 = vunpack.c.l.b16 %v231
        %v431 = vunpack.c.h.b16 %v231
        %v432 = vunpack.c.l.b16 %v232
        %v433 = vunpack.c.h.b16 %v232
        %v434 = vunpack.c.l.b16 %v233
        %v435 = vunpack.c.h.b16 %v233
        %v436 = vunpack.c.l.b16 %v234
        %v437 = vunpack.c.h.b16 %v234
        %v438 = vunpack.c.l.b16 %v235
        %v439 = vunpack.c.h.b16 %v235
        %v440 = vunpack.c.l.b16 %v236
        %v441 = vunpack.c.h.b16 %v236
        %v442 = vunpack.c.l.b16 %v237
        %v443 = vunpack.c.h.b16 %v237
        %v444 = vunpack.c.l.b16 %v238
        %v445 = vunpack.c.h.b16 %v238
        %v446 = vunpack.c.l.b16 %v239
        %v447 = vunpack.c.h.b16 %v239
        %v448 = vpack.c.b16 %v322, %v320
        %v449 = vpack.c.b16 %v323, %v321
        %v450 = vpack.c.b16 %v326, %v324
        %v451 = vpack.c.b16 %v327, %v325
        %v452 = vpack.c.b16 %v330, %v328
        %v453 = vpack.c.b16 %v331, %v329
        %v454 = vpack.c.b16 %v334, %v332
        %v455 = vpack.c.b16 %v335, %v333
        %v456 = vpack.c.b16 %v338, %v336
        %v457 = vpack.c.b16 %v339, %v337
        %v458 = vpack.c.b16 %v342, %v340
        %v459 = vpack.c.b16 %v343, %v341
        %v460 = vpack.c.b16 %v346, %v344
        %v461 = vpack.c.b16 %v347, %v345
        %v462 = vpack.c.b16 %v350, %v348
        %v463 = vpack.c.b16 %v351, %v349
        %v464 = vpack.c.b16 %v354, %v352
        %v465 = vpack.c.b16 %v355, %v353
        %v466 = vpack.c.b16 %v358, %v356
        %v467 = vpack.c.b16 %v359, %v357
        %v468 = vpack.c.b16 %v362, %v360
        %v469 = vpack.c.b16 %v363, %v361
        %v470 = vpack.c.b16 %v366, %v364
        %v471 = vpack.c.b16 %v367, %v365
        %v472 = vpack.c.b16 %v370, %v368
        %v473 = vpack.c.b16 %v371, %v369
        %v474 = vpack.c.b16 %v374, %v372
        %v475 = vpack.c.b16 %v375, %v373
        %v476 = vpack.c.b16 %v378, %v376
        %v477 = vpack.c.b16 %v379, %v377
        %v478 = vpack.c.b16 %v382, %v380
        %v479 = vpack.c.b16 %v383, %v381
        %v480 = vpack.c.b16 %v386, %v384
        %v481 = vpack.c.b16 %v387, %v385
        %v482 = vpack.c.b16 %v390, %v388
        %v483 = vpack.c.b16 %v391, %v389
        %v484 = vpack.c.b16 %v394, %v392
        %v485 = vpack.c.b16 %v395, %v393
        %v486 = vpack.c.b16 %v398, %v396
        %v487 = vpack.c.b16 %v399, %v397
        %v488 = vpack.c.b16 %v402, %v400
        %v489 = vpack.c.b16 %v403, %v401
        %v490 = vpack.c.b16 %v406, %v404
        %v491 = vpack.c.b16 %v407, %v405
        %v492 = vpack.c.b16 %v410, %v408
        %v493 = vpack.c.b16 %v411, %v409
        %v494 = vpack.c.b16 %v414, %v412
        %v495 = vpack.c.b16 %v415, %v413
        %v496 = vpack.c.b16 %v418, %v416
        %v497 = vpack.c.b16 %v419, %v417
        %v498 = vpack.c.b16 %v422, %v420
        %v499 = vpack.c.b16 %v423, %v421
        %v500 = vpack.c.b16 %v426, %v424
        %v501 = vpack.c.b16 %v427, %v425
        %v502 = vpack.c.b16 %v430, %v428
        %v503 = vpack.c.b16 %v431, %v429
        %v504 = vpack.c.b16 %v434, %v432
        %v505 = vpack.c.b16 %v435, %v433
        %v506 = vpack.c.b16 %v438, %v436
        %v507 = vpack.c.b16 %v439, %v437
        %v508 = vpack.c.b16 %v442, %v440
        %v509 = vpack.c.b16 %v443, %v441
        %v510 = vpack.c.b16 %v446, %v444
        %v511 = vpack.c.b16 %v447, %v445
        %v592 = vunpack.c.l.b16 %v240
        %v593 = vunpack.c.h.b16 %v240
        %v594 = vunpack.c.l.b16 %v241
        %v595 = vunpack.c.h.b16 %v241
        %v596 = vunpack.c.l.b16 %v242
        %v597 = vunpack.c.h.b16 %v242
        %v598 = vunpack.c.l.b16 %v243
        %v599 = vunpack.c.h.b16 %v243
        %v600 = vunpack.c.l.b16 %v244
        %v601 = vunpack.c.h.b16 %v244
        %v602 = vunpack.c.l.b16 %v245
        %v603 = vunpack.c.h.b16 %v245
        %v604 = vunpack.c.l.b16 %v246
        %v605 = vunpack.c.h.b16 %v246
        %v606 = vunpack.c.l.b16 %v247
        %v607 = vunpack.c.h.b16 %v247
        %v608 = vunpack.c.l.b16 %v248
        %v609 = vunpack.c.h.b16 %v248
        %v610 = vunpack.c.l.b16 %v249
        %v611 = vunpack.c.h.b16 %v249
        %v612 = vunpack.c.l.b16 %v250
        %v613 = vunpack.c.h.b16 %v250
        %v614 = vunpack.c.l.b16 %v251
        %v615 = vunpack.c.h.b16 %v251
        %v616 = vunpack.c.l.b16 %v252
        %v617 = vunpack.c.h.b16 %v252
        %v618 = vunpack.c.l.b16 %v253
        %v619 = vunpack.c.h.b16 %v253
        %v620 = vunpack.c.l.b16 %v254
        %v621 = vunpack.c.h.b16 %v254
        %v622 = vunpack.c.l.b16 %v255
        %v623 = vunpack.c.h.b16 %v255
        %v624 = vpack.c.b16 %v594, %v592
        %v625 = vpack.c.b16 %v595, %v593
        %v626 = vpack.c.b16 %v598, %v596
        %v627 = vpack.c.b16 %v599, %v597
        %v628 = vpack.c.b16 %v602, %v600
        %v629 = vpack.c.b16 %v603, %v601
        %v630 = vpack.c.b16 %v606, %v604
        %v631 = vpack.c.b16 %v607, %v605
        %v632 = vpack.c.b16 %v610, %v608
        %v633 = vpack.c.b16 %v611, %v609
        %v634 = vpack.c.b16 %v614, %v612
        %v635 = vpack.c.b16 %v615, %v613
        %v636 = vpack.c.b16 %v618, %v616
        %v637 = vpack.c.b16 %v619, %v617
        %v638 = vpack.c.b16 %v622, %v620
        %v639 = vpack.c.b16 %v623, %v621
        %656 = vmatprep.subr.bf16.mxu0 %v639
        %657 = vmatpush1.bf16.xpose.msra.mxu0 %v638
        %658 = vmatprep.subr.bf16.mxu0 %v637
        %659 = vmatpush1.bf16.xpose.msra.mxu0 %v636
        %660 = vmatprep.subr.bf16.mxu0 %v635
        %661 = vmatpush1.bf16.xpose.msra.mxu0 %v634
        %662 = vmatprep.subr.bf16.mxu0 %v633
        %663 = vmatpush1.bf16.xpose.msra.mxu0 %v632
        %664 = vmatprep.subr.bf16.mxu0 %v631
        %665 = vmatpush1.bf16.xpose.msra.mxu0 %v630
        %666 = vmatprep.subr.bf16.mxu0 %v629
        %667 = vmatpush1.bf16.xpose.msra.mxu0 %v628
        %668 = vmatprep.subr.bf16.mxu0 %v627
        %669 = vmatpush1.bf16.xpose.msra.mxu0 %v626
        %670 = vmatprep.subr.bf16.mxu0 %v625
        %671 = vmatpush1.bf16.xpose.msra.mxu0 %v624
        %672 = vmatprep.subr.bf16.mxu0 0
        %673 = vmatpush2.bf16.xpose.msra.mxu0 0
        %674 = vmatprep.subr.bf16.mxu0 0
        %675 = vmatpush2.bf16.xpose.msra.mxu0 0
        %676 = vmatprep.subr.bf16.mxu0 0
        %677 = vmatpush2.bf16.xpose.msra.mxu0 0
        %678 = vmatprep.subr.bf16.mxu0 0
        %679 = vmatpush2.bf16.xpose.msra.mxu0 0
        %680 = vmatprep.subr.bf16.mxu0 0
        %681 = vmatpush2.bf16.xpose.msra.mxu0 0
        %682 = vmatprep.subr.bf16.mxu0 0
        %683 = vmatpush2.bf16.xpose.msra.mxu0 0
        %684 = vmatprep.subr.bf16.mxu0 0
        %685 = vmatpush2.bf16.xpose.msra.mxu0 0
        %686 = vmatprep.subr.bf16.mxu0 0
        %687 = vmatpush2.bf16.xpose.msra.mxu0 0
        %688 = vmatprep.mubr.bf16.mxu0 %v449
        %689 = vmatmul.mubr.bf16.gmra.mxu0 %v448
        %v690 = vpop.f32.mrf.mxu0
        %v691 = vadd.f32 0.0, %v690
        %v692 = vpop.f32.mrf.mxu0
        %v693 = vpop.f32.mrf.mxu0
        %v694 = vadd.f32 0.0, %v693
        %v695 = vpop.f32.mrf.mxu0
        %696 = vmatprep.mubr.bf16.mxu0 %v451
        %697 = vmatmul.mubr.bf16.gmra.mxu0 %v450
        %v698 = vpop.f32.mrf.mxu0
        %v699 = vadd.f32 0.0, %v698
        %v700 = vpop.f32.mrf.mxu0
        %v701 = vpop.f32.mrf.mxu0
        %v702 = vadd.f32 0.0, %v701
        %v703 = vpop.f32.mrf.mxu0
        %704 = vmatprep.mubr.bf16.mxu0 %v453
        %705 = vmatmul.mubr.bf16.gmra.mxu0 %v452
        %v706 = vpop.f32.mrf.mxu0
        %v707 = vadd.f32 0.0, %v706
        %v708 = vpop.f32.mrf.mxu0
        %v709 = vpop.f32.mrf.mxu0
        %v710 = vadd.f32 0.0, %v709
        %v711 = vpop.f32.mrf.mxu0
        %712 = vmatprep.mubr.bf16.mxu0 %v455
        %713 = vmatmul.mubr.bf16.gmra.mxu0 %v454
        %v714 = vpop.f32.mrf.mxu0
        %v715 = vadd.f32 0.0, %v714
        %v716 = vpop.f32.mrf.mxu0
        %v717 = vpop.f32.mrf.mxu0
        %v718 = vadd.f32 0.0, %v717
        %v719 = vpop.f32.mrf.mxu0
        %720 = vmatprep.mubr.bf16.mxu0 %v457
        %721 = vmatmul.mubr.bf16.gmra.mxu0 %v456
        %v722 = vpop.f32.mrf.mxu0
        %v723 = vadd.f32 0.0, %v722
        %v724 = vpop.f32.mrf.mxu0
        %v725 = vpop.f32.mrf.mxu0
        %v726 = vadd.f32 0.0, %v725
        %v727 = vpop.f32.mrf.mxu0
        %728 = vmatprep.mubr.bf16.mxu0 %v459
        %729 = vmatmul.mubr.bf16.gmra.mxu0 %v458
        %v730 = vpop.f32.mrf.mxu0
        %v731 = vadd.f32 0.0, %v730
        %v732 = vpop.f32.mrf.mxu0
        %v733 = vpop.f32.mrf.mxu0
        %v734 = vadd.f32 0.0, %v733
        %v735 = vpop.f32.mrf.mxu0
        %736 = vmatprep.mubr.bf16.mxu0 %v461
        %737 = vmatmul.mubr.bf16.gmra.mxu0 %v460
        %v738 = vpop.f32.mrf.mxu0
        %v739 = vadd.f32 0.0, %v738
        %v740 = vpop.f32.mrf.mxu0
        %v741 = vpop.f32.mrf.mxu0
        %v742 = vadd.f32 0.0, %v741
        %v743 = vpop.f32.mrf.mxu0
        %744 = vmatprep.mubr.bf16.mxu0 %v463
        %745 = vmatmul.mubr.bf16.gmra.mxu0 %v462
        %v746 = vpop.f32.mrf.mxu0
        %v747 = vadd.f32 0.0, %v746
        %v748 = vpop.f32.mrf.mxu0
        %v749 = vpop.f32.mrf.mxu0
        %v750 = vadd.f32 0.0, %v749
        %v751 = vpop.f32.mrf.mxu0
        %752 = vmatprep.mubr.bf16.mxu0 %v465
        %753 = vmatmul.mubr.bf16.gmra.mxu0 %v464
        %v754 = vpop.f32.mrf.mxu0
        %v755 = vadd.f32 0.0, %v754
        %v756 = vpop.f32.mrf.mxu0
        %v757 = vpop.f32.mrf.mxu0
        %v758 = vadd.f32 0.0, %v757
        %v759 = vpop.f32.mrf.mxu0
        %760 = vmatprep.mubr.bf16.mxu0 %v467
        %761 = vmatmul.mubr.bf16.gmra.mxu0 %v466
        %v762 = vpop.f32.mrf.mxu0
        %v763 = vadd.f32 0.0, %v762
        %v764 = vpop.f32.mrf.mxu0
        %v765 = vpop.f32.mrf.mxu0
        %v766 = vadd.f32 0.0, %v765
        %v767 = vpop.f32.mrf.mxu0
        %768 = vmatprep.mubr.bf16.mxu0 %v469
        %769 = vmatmul.mubr.bf16.gmra.mxu0 %v468
        %v770 = vpop.f32.mrf.mxu0
        %v771 = vadd.f32 0.0, %v770
        %v772 = vpop.f32.mrf.mxu0
        %v773 = vpop.f32.mrf.mxu0
        %v774 = vadd.f32 0.0, %v773
        %v775 = vpop.f32.mrf.mxu0
        %776 = vmatprep.mubr.bf16.mxu0 %v471
        %777 = vmatmul.mubr.bf16.gmra.mxu0 %v470
        %v778 = vpop.f32.mrf.mxu0
        %v779 = vadd.f32 0.0, %v778
        %v780 = vpop.f32.mrf.mxu0
        %v781 = vpop.f32.mrf.mxu0
        %v782 = vadd.f32 0.0, %v781
        %v783 = vpop.f32.mrf.mxu0
        %784 = vmatprep.mubr.bf16.mxu0 %v473
        %785 = vmatmul.mubr.bf16.gmra.mxu0 %v472
        %v786 = vpop.f32.mrf.mxu0
        %v787 = vadd.f32 0.0, %v786
        %v788 = vpop.f32.mrf.mxu0
        %v789 = vpop.f32.mrf.mxu0
        %v790 = vadd.f32 0.0, %v789
        %v791 = vpop.f32.mrf.mxu0
        %792 = vmatprep.mubr.bf16.mxu0 %v475
        %793 = vmatmul.mubr.bf16.gmra.mxu0 %v474
        %v794 = vpop.f32.mrf.mxu0
        %v795 = vadd.f32 0.0, %v794
        %v796 = vpop.f32.mrf.mxu0
        %v797 = vpop.f32.mrf.mxu0
        %v798 = vadd.f32 0.0, %v797
        %v799 = vpop.f32.mrf.mxu0
        %800 = vmatprep.mubr.bf16.mxu0 %v477
        %801 = vmatmul.mubr.bf16.gmra.mxu0 %v476
        %v802 = vpop.f32.mrf.mxu0
        %v803 = vadd.f32 0.0, %v802
        %v804 = vpop.f32.mrf.mxu0
        %v805 = vpop.f32.mrf.mxu0
        %v806 = vadd.f32 0.0, %v805
        %v807 = vpop.f32.mrf.mxu0
        %808 = vmatprep.mubr.bf16.mxu0 %v479
        %809 = vmatmul.mubr.bf16.gmra.mxu0 %v478
        %v810 = vpop.f32.mrf.mxu0
        %v811 = vadd.f32 0.0, %v810
        %v812 = vpop.f32.mrf.mxu0
        %v813 = vpop.f32.mrf.mxu0
        %v814 = vadd.f32 0.0, %v813
        %v815 = vpop.f32.mrf.mxu0
        %816 = vmatprep.mubr.bf16.mxu0 %v481
        %817 = vmatmul.mubr.bf16.gmra.mxu0 %v480
        %v818 = vpop.f32.mrf.mxu0
        %v819 = vadd.f32 0.0, %v818
        %v820 = vpop.f32.mrf.mxu0
        %v821 = vpop.f32.mrf.mxu0
        %v822 = vadd.f32 0.0, %v821
        %v823 = vpop.f32.mrf.mxu0
        %824 = vmatprep.mubr.bf16.mxu0 %v483
        %825 = vmatmul.mubr.bf16.gmra.mxu0 %v482
        %v826 = vpop.f32.mrf.mxu0
        %v827 = vadd.f32 0.0, %v826
        %v828 = vpop.f32.mrf.mxu0
        %v829 = vpop.f32.mrf.mxu0
        %v830 = vadd.f32 0.0, %v829
        %v831 = vpop.f32.mrf.mxu0
        %832 = vmatprep.mubr.bf16.mxu0 %v485
        %833 = vmatmul.mubr.bf16.gmra.mxu0 %v484
        %v834 = vpop.f32.mrf.mxu0
        %v835 = vadd.f32 0.0, %v834
        %v836 = vpop.f32.mrf.mxu0
        %v837 = vpop.f32.mrf.mxu0
        %v838 = vadd.f32 0.0, %v837
        %v839 = vpop.f32.mrf.mxu0
        %840 = vmatprep.mubr.bf16.mxu0 %v487
        %841 = vmatmul.mubr.bf16.gmra.mxu0 %v486
        %v842 = vpop.f32.mrf.mxu0
        %v843 = vadd.f32 0.0, %v842
        %v844 = vpop.f32.mrf.mxu0
        %v845 = vpop.f32.mrf.mxu0
        %v846 = vadd.f32 0.0, %v845
        %v847 = vpop.f32.mrf.mxu0
        %848 = vmatprep.mubr.bf16.mxu0 %v489
        %849 = vmatmul.mubr.bf16.gmra.mxu0 %v488
        %v850 = vpop.f32.mrf.mxu0
        %v851 = vadd.f32 0.0, %v850
        %v852 = vpop.f32.mrf.mxu0
        %v853 = vpop.f32.mrf.mxu0
        %v854 = vadd.f32 0.0, %v853
        %v855 = vpop.f32.mrf.mxu0
        %856 = vmatprep.mubr.bf16.mxu0 %v491
        %857 = vmatmul.mubr.bf16.gmra.mxu0 %v490
        %v858 = vpop.f32.mrf.mxu0
        %v859 = vadd.f32 0.0, %v858
        %v860 = vpop.f32.mrf.mxu0
        %v861 = vpop.f32.mrf.mxu0
        %v862 = vadd.f32 0.0, %v861
        %v863 = vpop.f32.mrf.mxu0
        %864 = vmatprep.mubr.bf16.mxu0 %v493
        %865 = vmatmul.mubr.bf16.gmra.mxu0 %v492
        %v866 = vpop.f32.mrf.mxu0
        %v867 = vadd.f32 0.0, %v866
        %v868 = vpop.f32.mrf.mxu0
        %v869 = vpop.f32.mrf.mxu0
        %v870 = vadd.f32 0.0, %v869
        %v871 = vpop.f32.mrf.mxu0
        %872 = vmatprep.mubr.bf16.mxu0 %v495
        %873 = vmatmul.mubr.bf16.gmra.mxu0 %v494
        %v874 = vpop.f32.mrf.mxu0
        %v875 = vadd.f32 0.0, %v874
        %v876 = vpop.f32.mrf.mxu0
        %v877 = vpop.f32.mrf.mxu0
        %v878 = vadd.f32 0.0, %v877
        %v879 = vpop.f32.mrf.mxu0
        %880 = vmatprep.mubr.bf16.mxu0 %v497
        %881 = vmatmul.mubr.bf16.gmra.mxu0 %v496
        %v882 = vpop.f32.mrf.mxu0
        %v883 = vadd.f32 0.0, %v882
        %v884 = vpop.f32.mrf.mxu0
        %v885 = vpop.f32.mrf.mxu0
        %v886 = vadd.f32 0.0, %v885
        %v887 = vpop.f32.mrf.mxu0
        %888 = vmatprep.mubr.bf16.mxu0 %v499
        %889 = vmatmul.mubr.bf16.gmra.mxu0 %v498
        %v890 = vpop.f32.mrf.mxu0
        %v891 = vadd.f32 0.0, %v890
        %v892 = vpop.f32.mrf.mxu0
        %v893 = vpop.f32.mrf.mxu0
        %v894 = vadd.f32 0.0, %v893
        %v895 = vpop.f32.mrf.mxu0
        %896 = vmatprep.mubr.bf16.mxu0 %v501
        %897 = vmatmul.mubr.bf16.gmra.mxu0 %v500
        %v898 = vpop.f32.mrf.mxu0
        %v899 = vadd.f32 0.0, %v898
        %v900 = vpop.f32.mrf.mxu0
        %v901 = vpop.f32.mrf.mxu0
        %v902 = vadd.f32 0.0, %v901
        %v903 = vpop.f32.mrf.mxu0
        %904 = vmatprep.mubr.bf16.mxu0 %v503
        %905 = vmatmul.mubr.bf16.gmra.mxu0 %v502
        %v906 = vpop.f32.mrf.mxu0
        %v907 = vadd.f32 0.0, %v906
        %v908 = vpop.f32.mrf.mxu0
        %v909 = vpop.f32.mrf.mxu0
        %v910 = vadd.f32 0.0, %v909
        %v911 = vpop.f32.mrf.mxu0
        %912 = vmatprep.mubr.bf16.mxu0 %v505
        %913 = vmatmul.mubr.bf16.gmra.mxu0 %v504
        %v914 = vpop.f32.mrf.mxu0
        %v915 = vadd.f32 0.0, %v914
        %v916 = vpop.f32.mrf.mxu0
        %v917 = vpop.f32.mrf.mxu0
        %v918 = vadd.f32 0.0, %v917
        %v919 = vpop.f32.mrf.mxu0
        %920 = vmatprep.mubr.bf16.mxu0 %v507
        %921 = vmatmul.mubr.bf16.gmra.mxu0 %v506
        %v922 = vpop.f32.mrf.mxu0
        %v923 = vadd.f32 0.0, %v922
        %v924 = vpop.f32.mrf.mxu0
        %v925 = vpop.f32.mrf.mxu0
        %v926 = vadd.f32 0.0, %v925
        %v927 = vpop.f32.mrf.mxu0
        %928 = vmatprep.mubr.bf16.mxu0 %v509
        %929 = vmatmul.mubr.bf16.gmra.mxu0 %v508
        %v930 = vpop.f32.mrf.mxu0
        %v931 = vadd.f32 0.0, %v930
        %v932 = vpop.f32.mrf.mxu0
        %v933 = vpop.f32.mrf.mxu0
        %v934 = vadd.f32 0.0, %v933
        %v935 = vpop.f32.mrf.mxu0
        %936 = vmatprep.mubr.bf16.mxu0 %v511
        %937 = vmatmul.mubr.bf16.gmra.mxu0 %v510
        %v938 = vpop.f32.mrf.mxu0
        %v939 = vadd.f32 0.0, %v938
        %v940 = vpop.f32.mrf.mxu0
        %v941 = vpop.f32.mrf.mxu0
        %v942 = vadd.f32 0.0, %v941
        %v943 = vpop.f32.mrf.mxu0
        %944 = vdwg.mxu0
        %v945 = vpack.c.bf16 %v694, %v691
        %v946 = vpack.c.bf16 %v702, %v699
        %v947 = vpack.c.bf16 %v710, %v707
        %v948 = vpack.c.bf16 %v718, %v715
        %v949 = vpack.c.bf16 %v726, %v723
        %v950 = vpack.c.bf16 %v734, %v731
        %v951 = vpack.c.bf16 %v742, %v739
        %v952 = vpack.c.bf16 %v750, %v747
        %v953 = vpack.c.bf16 %v758, %v755
        %v954 = vpack.c.bf16 %v766, %v763
        %v955 = vpack.c.bf16 %v774, %v771
        %v956 = vpack.c.bf16 %v782, %v779
        %v957 = vpack.c.bf16 %v790, %v787
        %v958 = vpack.c.bf16 %v798, %v795
        %v959 = vpack.c.bf16 %v806, %v803
        %v960 = vpack.c.bf16 %v814, %v811
        %v961 = vpack.c.bf16 %v822, %v819
        %v962 = vpack.c.bf16 %v830, %v827
        %v963 = vpack.c.bf16 %v838, %v835
        %v964 = vpack.c.bf16 %v846, %v843
        %v965 = vpack.c.bf16 %v854, %v851
        %v966 = vpack.c.bf16 %v862, %v859
        %v967 = vpack.c.bf16 %v870, %v867
        %v968 = vpack.c.bf16 %v878, %v875
        %v969 = vpack.c.bf16 %v886, %v883
        %v970 = vpack.c.bf16 %v894, %v891
        %v971 = vpack.c.bf16 %v902, %v899
        %v972 = vpack.c.bf16 %v910, %v907
        %v973 = vpack.c.bf16 %v918, %v915
        %v974 = vpack.c.bf16 %v926, %v923
        %v975 = vpack.c.bf16 %v934, %v931
        %v976 = vpack.c.bf16 %v942, %v939
        %v977 = vld [vmem:[%s2] sm:$0xf]
        %v978 = vld [vmem:[%s2 + $0x4] sm:$0xf]
        %v979 = vld [vmem:[%s2 + $0x8] sm:$0xf]
        %v980 = vld [vmem:[%s2 + $0xc] sm:$0xf]
        %v981 = vld [vmem:[%s2 + $0x10] sm:$0xf]
        %v982 = vld [vmem:[%s2 + $0x14] sm:$0xf]
        %v983 = vld [vmem:[%s2 + $0x18] sm:$0xf]
        %v984 = vld [vmem:[%s2 + $0x1c] sm:$0xf]
        %v985 = vld [vmem:[%s2 + $0x20] sm:$0xf]
        %v986 = vld [vmem:[%s2 + $0x24] sm:$0xf]
        %v987 = vld [vmem:[%s2 + $0x28] sm:$0xf]
        %v988 = vld [vmem:[%s2 + $0x2c] sm:$0xf]
        %v989 = vld [vmem:[%s2 + $0x30] sm:$0xf]
        %v990 = vld [vmem:[%s2 + $0x34] sm:$0xf]
        %v991 = vld [vmem:[%s2 + $0x38] sm:$0xf]
        %v992 = vld [vmem:[%s2 + $0x3c] sm:$0xf]
        %v993 = vld [vmem:[%s2 + $0x40] sm:$0xf]
        %v994 = vld [vmem:[%s2 + $0x44] sm:$0xf]
        %v995 = vld [vmem:[%s2 + $0x48] sm:$0xf]
        %v996 = vld [vmem:[%s2 + $0x4c] sm:$0xf]
        %v997 = vld [vmem:[%s2 + $0x50] sm:$0xf]
        %v998 = vld [vmem:[%s2 + $0x54] sm:$0xf]
        %v999 = vld [vmem:[%s2 + $0x58] sm:$0xf]
        %v1000 = vld [vmem:[%s2 + $0x5c] sm:$0xf]
        %v1001 = vld [vmem:[%s2 + $0x60] sm:$0xf]
        %v1002 = vld [vmem:[%s2 + $0x64] sm:$0xf]
        %v1003 = vld [vmem:[%s2 + $0x68] sm:$0xf]
        %v1004 = vld [vmem:[%s2 + $0x6c] sm:$0xf]
        %v1005 = vld [vmem:[%s2 + $0x70] sm:$0xf]
        %v1006 = vld [vmem:[%s2 + $0x74] sm:$0xf]
        %v1007 = vld [vmem:[%s2 + $0x78] sm:$0xf]
        %v1008 = vld [vmem:[%s2 + $0x7c] sm:$0xf]
        %v1041 = vunpack.c.l.b16 %v977
        %v1042 = vunpack.c.l.b16 %v978
        %v1043 = vunpack.c.l.b16 %v979
        %v1044 = vunpack.c.l.b16 %v980
        %v1045 = vunpack.c.l.b16 %v981
        %v1046 = vunpack.c.l.b16 %v982
        %v1047 = vunpack.c.l.b16 %v983
        %v1048 = vunpack.c.l.b16 %v984
        %v1049 = vunpack.c.l.b16 %v985
        %v1050 = vunpack.c.l.b16 %v986
        %v1051 = vunpack.c.l.b16 %v987
        %v1052 = vunpack.c.l.b16 %v988
        %v1053 = vunpack.c.l.b16 %v989
        %v1054 = vunpack.c.l.b16 %v990
        %v1055 = vunpack.c.l.b16 %v991
        %v1056 = vunpack.c.l.b16 %v992
        %v1057 = vunpack.c.l.b16 %v993
        %v1058 = vunpack.c.l.b16 %v994
        %v1059 = vunpack.c.l.b16 %v995
        %v1060 = vunpack.c.l.b16 %v996
        %v1061 = vunpack.c.l.b16 %v997
        %v1062 = vunpack.c.l.b16 %v998
        %v1063 = vunpack.c.l.b16 %v999
        %v1064 = vunpack.c.l.b16 %v1000
        %v1065 = vunpack.c.l.b16 %v1001
        %v1066 = vunpack.c.l.b16 %v1002
        %v1067 = vunpack.c.l.b16 %v1003
        %v1068 = vunpack.c.l.b16 %v1004
        %v1069 = vunpack.c.l.b16 %v1005
        %v1070 = vunpack.c.l.b16 %v1006
        %v1071 = vunpack.c.l.b16 %v1007
        %v1072 = vunpack.c.l.b16 %v1008
        %v1073 = vpack.c.b16 %v1042, %v1041
        %v1074 = vpack.c.b16 %v1044, %v1043
        %v1075 = vpack.c.b16 %v1046, %v1045
        %v1076 = vpack.c.b16 %v1048, %v1047
        %v1077 = vpack.c.b16 %v1050, %v1049
        %v1078 = vpack.c.b16 %v1052, %v1051
        %v1079 = vpack.c.b16 %v1054, %v1053
        %v1080 = vpack.c.b16 %v1056, %v1055
        %v1081 = vpack.c.b16 %v1058, %v1057
        %v1082 = vpack.c.b16 %v1060, %v1059
        %v1083 = vpack.c.b16 %v1062, %v1061
        %v1084 = vpack.c.b16 %v1064, %v1063
        %v1085 = vpack.c.b16 %v1066, %v1065
        %v1086 = vpack.c.b16 %v1068, %v1067
        %v1087 = vpack.c.b16 %v1070, %v1069
        %v1088 = vpack.c.b16 %v1072, %v1071
        %1105 = vmatprep.subr.bf16.mxu0 0
        %1106 = vmatpush1.bf16.xpose.msra.mxu0 %v1080
        %1107 = vmatprep.subr.bf16.mxu0 0
        %1108 = vmatpush1.bf16.xpose.msra.mxu0 %v1079
        %1109 = vmatprep.subr.bf16.mxu0 0
        %1110 = vmatpush1.bf16.xpose.msra.mxu0 %v1078
        %1111 = vmatprep.subr.bf16.mxu0 0
        %1112 = vmatpush1.bf16.xpose.msra.mxu0 %v1077
        %1113 = vmatprep.subr.bf16.mxu0 0
        %1114 = vmatpush1.bf16.xpose.msra.mxu0 %v1076
        %1115 = vmatprep.subr.bf16.mxu0 0
        %1116 = vmatpush1.bf16.xpose.msra.mxu0 %v1075
        %1117 = vmatprep.subr.bf16.mxu0 0
        %1118 = vmatpush1.bf16.xpose.msra.mxu0 %v1074
        %1119 = vmatprep.subr.bf16.mxu0 0
        %1120 = vmatpush1.bf16.xpose.msra.mxu0 %v1073
        %1121 = vmatprep.subr.bf16.mxu0 0
        %1122 = vmatpush2.bf16.xpose.msra.mxu0 %v1088
        %1123 = vmatprep.subr.bf16.mxu0 0
        %1124 = vmatpush2.bf16.xpose.msra.mxu0 %v1087
        %1125 = vmatprep.subr.bf16.mxu0 0
        %1126 = vmatpush2.bf16.xpose.msra.mxu0 %v1086
        %1127 = vmatprep.subr.bf16.mxu0 0
        %1128 = vmatpush2.bf16.xpose.msra.mxu0 %v1085
        %1129 = vmatprep.subr.bf16.mxu0 0
        %1130 = vmatpush2.bf16.xpose.msra.mxu0 %v1084
        %1131 = vmatprep.subr.bf16.mxu0 0
        %1132 = vmatpush2.bf16.xpose.msra.mxu0 %v1083
        %1133 = vmatprep.subr.bf16.mxu0 0
        %1134 = vmatpush2.bf16.xpose.msra.mxu0 %v1082
        %1135 = vmatprep.subr.bf16.mxu0 0
        %1136 = vmatpush2.bf16.xpose.msra.mxu0 %v1081
        %1137 = vmatprep.mubr.bf16.mxu0 0
        %1138 = vmatmul.mubr.bf16.gmra.mxu0 %v945
        %v1139 = vpop.f32.mrf.mxu0
        %v1140 = vadd.f32 0.0, %v1139
        %v1141 = vpop.f32.mrf.mxu0
        %v1142 = vadd.f32 0.0, %v1141
        %v1143 = vpop.f32.mrf.mxu0
        %v1144 = vadd.f32 0.0, %v1143
        %v1145 = vpop.f32.mrf.mxu0
        %v1146 = vadd.f32 0.0, %v1145
        %1147 = vmatprep.mubr.bf16.mxu0 0
        %1148 = vmatmul.mubr.bf16.gmra.mxu0 %v946
        %v1149 = vpop.f32.mrf.mxu0
        %v1150 = vadd.f32 0.0, %v1149
        %v1151 = vpop.f32.mrf.mxu0
        %v1152 = vadd.f32 0.0, %v1151
        %v1153 = vpop.f32.mrf.mxu0
        %v1154 = vadd.f32 0.0, %v1153
        %v1155 = vpop.f32.mrf.mxu0
        %v1156 = vadd.f32 0.0, %v1155
        %1157 = vmatprep.mubr.bf16.mxu0 0
        %1158 = vmatmul.mubr.bf16.gmra.mxu0 %v947
        %v1159 = vpop.f32.mrf.mxu0
        %v1160 = vadd.f32 0.0, %v1159
        %v1161 = vpop.f32.mrf.mxu0
        %v1162 = vadd.f32 0.0, %v1161
        %v1163 = vpop.f32.mrf.mxu0
        %v1164 = vadd.f32 0.0, %v1163
        %v1165 = vpop.f32.mrf.mxu0
        %v1166 = vadd.f32 0.0, %v1165
        %1167 = vmatprep.mubr.bf16.mxu0 0
        %1168 = vmatmul.mubr.bf16.gmra.mxu0 %v948
        %v1169 = vpop.f32.mrf.mxu0
        %v1170 = vadd.f32 0.0, %v1169
        %v1171 = vpop.f32.mrf.mxu0
        %v1172 = vadd.f32 0.0, %v1171
        %v1173 = vpop.f32.mrf.mxu0
        %v1174 = vadd.f32 0.0, %v1173
        %v1175 = vpop.f32.mrf.mxu0
        %v1176 = vadd.f32 0.0, %v1175
        %1177 = vmatprep.mubr.bf16.mxu0 0
        %1178 = vmatmul.mubr.bf16.gmra.mxu0 %v949
        %v1179 = vpop.f32.mrf.mxu0
        %v1180 = vadd.f32 0.0, %v1179
        %v1181 = vpop.f32.mrf.mxu0
        %v1182 = vadd.f32 0.0, %v1181
        %v1183 = vpop.f32.mrf.mxu0
        %v1184 = vadd.f32 0.0, %v1183
        %v1185 = vpop.f32.mrf.mxu0
        %v1186 = vadd.f32 0.0, %v1185
        %1187 = vmatprep.mubr.bf16.mxu0 0
        %1188 = vmatmul.mubr.bf16.gmra.mxu0 %v950
        %v1189 = vpop.f32.mrf.mxu0
        %v1190 = vadd.f32 0.0, %v1189
        %v1191 = vpop.f32.mrf.mxu0
        %v1192 = vadd.f32 0.0, %v1191
        %v1193 = vpop.f32.mrf.mxu0
        %v1194 = vadd.f32 0.0, %v1193
        %v1195 = vpop.f32.mrf.mxu0
        %v1196 = vadd.f32 0.0, %v1195
        %1197 = vmatprep.mubr.bf16.mxu0 0
        %1198 = vmatmul.mubr.bf16.gmra.mxu0 %v951
        %v1199 = vpop.f32.mrf.mxu0
        %v1200 = vadd.f32 0.0, %v1199
        %v1201 = vpop.f32.mrf.mxu0
        %v1202 = vadd.f32 0.0, %v1201
        %v1203 = vpop.f32.mrf.mxu0
        %v1204 = vadd.f32 0.0, %v1203
        %v1205 = vpop.f32.mrf.mxu0
        %v1206 = vadd.f32 0.0, %v1205
        %1207 = vmatprep.mubr.bf16.mxu0 0
        %1208 = vmatmul.mubr.bf16.gmra.mxu0 %v952
        %v1209 = vpop.f32.mrf.mxu0
        %v1210 = vadd.f32 0.0, %v1209
        %v1211 = vpop.f32.mrf.mxu0
        %v1212 = vadd.f32 0.0, %v1211
        %v1213 = vpop.f32.mrf.mxu0
        %v1214 = vadd.f32 0.0, %v1213
        %v1215 = vpop.f32.mrf.mxu0
        %v1216 = vadd.f32 0.0, %v1215
        %1217 = vmatprep.mubr.bf16.mxu0 0
        %1218 = vmatmul.mubr.bf16.gmra.mxu0 %v953
        %v1219 = vpop.f32.mrf.mxu0
        %v1220 = vadd.f32 0.0, %v1219
        %v1221 = vpop.f32.mrf.mxu0
        %v1222 = vadd.f32 0.0, %v1221
        %v1223 = vpop.f32.mrf.mxu0
        %v1224 = vadd.f32 0.0, %v1223
        %v1225 = vpop.f32.mrf.mxu0
        %v1226 = vadd.f32 0.0, %v1225
        %1227 = vmatprep.mubr.bf16.mxu0 0
        %1228 = vmatmul.mubr.bf16.gmra.mxu0 %v954
        %v1229 = vpop.f32.mrf.mxu0
        %v1230 = vadd.f32 0.0, %v1229
        %v1231 = vpop.f32.mrf.mxu0
        %v1232 = vadd.f32 0.0, %v1231
        %v1233 = vpop.f32.mrf.mxu0
        %v1234 = vadd.f32 0.0, %v1233
        %v1235 = vpop.f32.mrf.mxu0
        %v1236 = vadd.f32 0.0, %v1235
        %1237 = vmatprep.mubr.bf16.mxu0 0
        %1238 = vmatmul.mubr.bf16.gmra.mxu0 %v955
        %v1239 = vpop.f32.mrf.mxu0
        %v1240 = vadd.f32 0.0, %v1239
        %v1241 = vpop.f32.mrf.mxu0
        %v1242 = vadd.f32 0.0, %v1241
        %v1243 = vpop.f32.mrf.mxu0
        %v1244 = vadd.f32 0.0, %v1243
        %v1245 = vpop.f32.mrf.mxu0
        %v1246 = vadd.f32 0.0, %v1245
        %1247 = vmatprep.mubr.bf16.mxu0 0
        %1248 = vmatmul.mubr.bf16.gmra.mxu0 %v956
        %v1249 = vpop.f32.mrf.mxu0
        %v1250 = vadd.f32 0.0, %v1249
        %v1251 = vpop.f32.mrf.mxu0
        %v1252 = vadd.f32 0.0, %v1251
        %v1253 = vpop.f32.mrf.mxu0
        %v1254 = vadd.f32 0.0, %v1253
        %v1255 = vpop.f32.mrf.mxu0
        %v1256 = vadd.f32 0.0, %v1255
        %1257 = vmatprep.mubr.bf16.mxu0 0
        %1258 = vmatmul.mubr.bf16.gmra.mxu0 %v957
        %v1259 = vpop.f32.mrf.mxu0
        %v1260 = vadd.f32 0.0, %v1259
        %v1261 = vpop.f32.mrf.mxu0
        %v1262 = vadd.f32 0.0, %v1261
        %v1263 = vpop.f32.mrf.mxu0
        %v1264 = vadd.f32 0.0, %v1263
        %v1265 = vpop.f32.mrf.mxu0
        %v1266 = vadd.f32 0.0, %v1265
        %1267 = vmatprep.mubr.bf16.mxu0 0
        %1268 = vmatmul.mubr.bf16.gmra.mxu0 %v958
        %v1269 = vpop.f32.mrf.mxu0
        %v1270 = vadd.f32 0.0, %v1269
        %v1271 = vpop.f32.mrf.mxu0
        %v1272 = vadd.f32 0.0, %v1271
        %v1273 = vpop.f32.mrf.mxu0
        %v1274 = vadd.f32 0.0, %v1273
        %v1275 = vpop.f32.mrf.mxu0
        %v1276 = vadd.f32 0.0, %v1275
        %1277 = vmatprep.mubr.bf16.mxu0 0
        %1278 = vmatmul.mubr.bf16.gmra.mxu0 %v959
        %v1279 = vpop.f32.mrf.mxu0
        %v1280 = vadd.f32 0.0, %v1279
        %v1281 = vpop.f32.mrf.mxu0
        %v1282 = vadd.f32 0.0, %v1281
        %v1283 = vpop.f32.mrf.mxu0
        %v1284 = vadd.f32 0.0, %v1283
        %v1285 = vpop.f32.mrf.mxu0
        %v1286 = vadd.f32 0.0, %v1285
        %1287 = vmatprep.mubr.bf16.mxu0 0
        %1288 = vmatmul.mubr.bf16.gmra.mxu0 %v960
        %v1289 = vpop.f32.mrf.mxu0
        %v1290 = vadd.f32 0.0, %v1289
        %v1291 = vpop.f32.mrf.mxu0
        %v1292 = vadd.f32 0.0, %v1291
        %v1293 = vpop.f32.mrf.mxu0
        %v1294 = vadd.f32 0.0, %v1293
        %v1295 = vpop.f32.mrf.mxu0
        %v1296 = vadd.f32 0.0, %v1295
        %1297 = vmatprep.mubr.bf16.mxu0 0
        %1298 = vmatmul.mubr.bf16.gmra.mxu0 %v961
        %v1299 = vpop.f32.mrf.mxu0
        %v1300 = vadd.f32 0.0, %v1299
        %v1301 = vpop.f32.mrf.mxu0
        %v1302 = vadd.f32 0.0, %v1301
        %v1303 = vpop.f32.mrf.mxu0
        %v1304 = vadd.f32 0.0, %v1303
        %v1305 = vpop.f32.mrf.mxu0
        %v1306 = vadd.f32 0.0, %v1305
        %1307 = vmatprep.mubr.bf16.mxu0 0
        %1308 = vmatmul.mubr.bf16.gmra.mxu0 %v962
        %v1309 = vpop.f32.mrf.mxu0
        %v1310 = vadd.f32 0.0, %v1309
        %v1311 = vpop.f32.mrf.mxu0
        %v1312 = vadd.f32 0.0, %v1311
        %v1313 = vpop.f32.mrf.mxu0
        %v1314 = vadd.f32 0.0, %v1313
        %v1315 = vpop.f32.mrf.mxu0
        %v1316 = vadd.f32 0.0, %v1315
        %1317 = vmatprep.mubr.bf16.mxu0 0
        %1318 = vmatmul.mubr.bf16.gmra.mxu0 %v963
        %v1319 = vpop.f32.mrf.mxu0
        %v1320 = vadd.f32 0.0, %v1319
        %v1321 = vpop.f32.mrf.mxu0
        %v1322 = vadd.f32 0.0, %v1321
        %v1323 = vpop.f32.mrf.mxu0
        %v1324 = vadd.f32 0.0, %v1323
        %v1325 = vpop.f32.mrf.mxu0
        %v1326 = vadd.f32 0.0, %v1325
        %1327 = vmatprep.mubr.bf16.mxu0 0
        %1328 = vmatmul.mubr.bf16.gmra.mxu0 %v964
        %v1329 = vpop.f32.mrf.mxu0
        %v1330 = vadd.f32 0.0, %v1329
        %v1331 = vpop.f32.mrf.mxu0
        %v1332 = vadd.f32 0.0, %v1331
        %v1333 = vpop.f32.mrf.mxu0
        %v1334 = vadd.f32 0.0, %v1333
        %v1335 = vpop.f32.mrf.mxu0
        %v1336 = vadd.f32 0.0, %v1335
        %1337 = vmatprep.mubr.bf16.mxu0 0
        %1338 = vmatmul.mubr.bf16.gmra.mxu0 %v965
        %v1339 = vpop.f32.mrf.mxu0
        %v1340 = vadd.f32 0.0, %v1339
        %v1341 = vpop.f32.mrf.mxu0
        %v1342 = vadd.f32 0.0, %v1341
        %v1343 = vpop.f32.mrf.mxu0
        %v1344 = vadd.f32 0.0, %v1343
        %v1345 = vpop.f32.mrf.mxu0
        %v1346 = vadd.f32 0.0, %v1345
        %1347 = vmatprep.mubr.bf16.mxu0 0
        %1348 = vmatmul.mubr.bf16.gmra.mxu0 %v966
        %v1349 = vpop.f32.mrf.mxu0
        %v1350 = vadd.f32 0.0, %v1349
        %v1351 = vpop.f32.mrf.mxu0
        %v1352 = vadd.f32 0.0, %v1351
        %v1353 = vpop.f32.mrf.mxu0
        %v1354 = vadd.f32 0.0, %v1353
        %v1355 = vpop.f32.mrf.mxu0
        %v1356 = vadd.f32 0.0, %v1355
        %1357 = vmatprep.mubr.bf16.mxu0 0
        %1358 = vmatmul.mubr.bf16.gmra.mxu0 %v967
        %v1359 = vpop.f32.mrf.mxu0
        %v1360 = vadd.f32 0.0, %v1359
        %v1361 = vpop.f32.mrf.mxu0
        %v1362 = vadd.f32 0.0, %v1361
        %v1363 = vpop.f32.mrf.mxu0
        %v1364 = vadd.f32 0.0, %v1363
        %v1365 = vpop.f32.mrf.mxu0
        %v1366 = vadd.f32 0.0, %v1365
        %1367 = vmatprep.mubr.bf16.mxu0 0
        %1368 = vmatmul.mubr.bf16.gmra.mxu0 %v968
        %v1369 = vpop.f32.mrf.mxu0
        %v1370 = vadd.f32 0.0, %v1369
        %v1371 = vpop.f32.mrf.mxu0
        %v1372 = vadd.f32 0.0, %v1371
        %v1373 = vpop.f32.mrf.mxu0
        %v1374 = vadd.f32 0.0, %v1373
        %v1375 = vpop.f32.mrf.mxu0
        %v1376 = vadd.f32 0.0, %v1375
        %1377 = vmatprep.mubr.bf16.mxu0 0
        %1378 = vmatmul.mubr.bf16.gmra.mxu0 %v969
        %v1379 = vpop.f32.mrf.mxu0
        %v1380 = vadd.f32 0.0, %v1379
        %v1381 = vpop.f32.mrf.mxu0
        %v1382 = vadd.f32 0.0, %v1381
        %v1383 = vpop.f32.mrf.mxu0
        %v1384 = vadd.f32 0.0, %v1383
        %v1385 = vpop.f32.mrf.mxu0
        %v1386 = vadd.f32 0.0, %v1385
        %1387 = vmatprep.mubr.bf16.mxu0 0
        %1388 = vmatmul.mubr.bf16.gmra.mxu0 %v970
        %v1389 = vpop.f32.mrf.mxu0
        %v1390 = vadd.f32 0.0, %v1389
        %v1391 = vpop.f32.mrf.mxu0
        %v1392 = vadd.f32 0.0, %v1391
        %v1393 = vpop.f32.mrf.mxu0
        %v1394 = vadd.f32 0.0, %v1393
        %v1395 = vpop.f32.mrf.mxu0
        %v1396 = vadd.f32 0.0, %v1395
        %1397 = vmatprep.mubr.bf16.mxu0 0
        %1398 = vmatmul.mubr.bf16.gmra.mxu0 %v971
        %v1399 = vpop.f32.mrf.mxu0
        %v1400 = vadd.f32 0.0, %v1399
        %v1401 = vpop.f32.mrf.mxu0
        %v1402 = vadd.f32 0.0, %v1401
        %v1403 = vpop.f32.mrf.mxu0
        %v1404 = vadd.f32 0.0, %v1403
        %v1405 = vpop.f32.mrf.mxu0
        %v1406 = vadd.f32 0.0, %v1405
        %1407 = vmatprep.mubr.bf16.mxu0 0
        %1408 = vmatmul.mubr.bf16.gmra.mxu0 %v972
        %v1409 = vpop.f32.mrf.mxu0
        %v1410 = vadd.f32 0.0, %v1409
        %v1411 = vpop.f32.mrf.mxu0
        %v1412 = vadd.f32 0.0, %v1411
        %v1413 = vpop.f32.mrf.mxu0
        %v1414 = vadd.f32 0.0, %v1413
        %v1415 = vpop.f32.mrf.mxu0
        %v1416 = vadd.f32 0.0, %v1415
        %1417 = vmatprep.mubr.bf16.mxu0 0
        %1418 = vmatmul.mubr.bf16.gmra.mxu0 %v973
        %v1419 = vpop.f32.mrf.mxu0
        %v1420 = vadd.f32 0.0, %v1419
        %v1421 = vpop.f32.mrf.mxu0
        %v1422 = vadd.f32 0.0, %v1421
        %v1423 = vpop.f32.mrf.mxu0
        %v1424 = vadd.f32 0.0, %v1423
        %v1425 = vpop.f32.mrf.mxu0
        %v1426 = vadd.f32 0.0, %v1425
        %1427 = vmatprep.mubr.bf16.mxu0 0
        %1428 = vmatmul.mubr.bf16.gmra.mxu0 %v974
        %v1429 = vpop.f32.mrf.mxu0
        %v1430 = vadd.f32 0.0, %v1429
        %v1431 = vpop.f32.mrf.mxu0
        %v1432 = vadd.f32 0.0, %v1431
        %v1433 = vpop.f32.mrf.mxu0
        %v1434 = vadd.f32 0.0, %v1433
        %v1435 = vpop.f32.mrf.mxu0
        %v1436 = vadd.f32 0.0, %v1435
        %1437 = vmatprep.mubr.bf16.mxu0 0
        %1438 = vmatmul.mubr.bf16.gmra.mxu0 %v975
        %v1439 = vpop.f32.mrf.mxu0
        %v1440 = vadd.f32 0.0, %v1439
        %v1441 = vpop.f32.mrf.mxu0
        %v1442 = vadd.f32 0.0, %v1441
        %v1443 = vpop.f32.mrf.mxu0
        %v1444 = vadd.f32 0.0, %v1443
        %v1445 = vpop.f32.mrf.mxu0
        %v1446 = vadd.f32 0.0, %v1445
        %1447 = vmatprep.mubr.bf16.mxu0 0
        %1448 = vmatmul.mubr.bf16.gmra.mxu0 %v976
        %v1449 = vpop.f32.mrf.mxu0
        %v1450 = vadd.f32 0.0, %v1449
        %v1451 = vpop.f32.mrf.mxu0
        %v1452 = vadd.f32 0.0, %v1451
        %v1453 = vpop.f32.mrf.mxu0
        %v1454 = vadd.f32 0.0, %v1453
        %v1455 = vpop.f32.mrf.mxu0
        %v1456 = vadd.f32 0.0, %v1455
        %1457 = vdwg.mxu0
        %1458 = vst [vmem:[%s166] sm:$0xff] %v1140
        %1459 = vst [vmem:[%s166 + $0x8] sm:$0xff] %v1142
        %1460 = vst [vmem:[%s166 + $0x10] sm:$0xff] %v1144
        %1461 = vst [vmem:[%s166 + $0x18] sm:$0xff] %v1146
        %1462 = vst [vmem:[%s166 + $0x20] sm:$0xff] %v1150
        %1463 = vst [vmem:[%s166 + $0x28] sm:$0xff] %v1152
        %1464 = vst [vmem:[%s166 + $0x30] sm:$0xff] %v1154
        %1465 = vst [vmem:[%s166 + $0x38] sm:$0xff] %v1156
        %1466 = vst [vmem:[%s166 + $0x40] sm:$0xff] %v1160
        %1467 = vst [vmem:[%s166 + $0x48] sm:$0xff] %v1162
        %1468 = vst [vmem:[%s166 + $0x50] sm:$0xff] %v1164
        %1469 = vst [vmem:[%s166 + $0x58] sm:$0xff] %v1166
        %1470 = vst [vmem:[%s166 + $0x60] sm:$0xff] %v1170
        %1471 = vst [vmem:[%s166 + $0x68] sm:$0xff] %v1172
        %1472 = vst [vmem:[%s166 + $0x70] sm:$0xff] %v1174
        %1473 = vst [vmem:[%s166 + $0x78] sm:$0xff] %v1176
        %1474 = vst [vmem:[%s166 + $0x80] sm:$0xff] %v1180
        %1475 = vst [vmem:[%s166 + $0x88] sm:$0xff] %v1182
        %1476 = vst [vmem:[%s166 + $0x90] sm:$0xff] %v1184
        %1477 = vst [vmem:[%s166 + $0x98] sm:$0xff] %v1186
        %1478 = vst [vmem:[%s166 + $0xa0] sm:$0xff] %v1190
        %1479 = vst [vmem:[%s166 + $0xa8] sm:$0xff] %v1192
        %1480 = vst [vmem:[%s166 + $0xb0] sm:$0xff] %v1194
        %1481 = vst [vmem:[%s166 + $0xb8] sm:$0xff] %v1196
        %1482 = vst [vmem:[%s166 + $0xc0] sm:$0xff] %v1200
        %1483 = vst [vmem:[%s166 + $0xc8] sm:$0xff] %v1202
        %1484 = vst [vmem:[%s166 + $0xd0] sm:$0xff] %v1204
        %1485 = vst [vmem:[%s166 + $0xd8] sm:$0xff] %v1206
        %1486 = vst [vmem:[%s166 + $0xe0] sm:$0xff] %v1210
        %1487 = vst [vmem:[%s166 + $0xe8] sm:$0xff] %v1212
        %1488 = vst [vmem:[%s166 + $0xf0] sm:$0xff] %v1214
        %1489 = vst [vmem:[%s166 + $0xf8] sm:$0xff] %v1216
        %1490 = vst [vmem:[%s166 + $0x100] sm:$0xff] %v1220
        %1491 = vst [vmem:[%s166 + $0x108] sm:$0xff] %v1222
        %1492 = vst [vmem:[%s166 + $0x110] sm:$0xff] %v1224
        %1493 = vst [vmem:[%s166 + $0x118] sm:$0xff] %v1226
        %1494 = vst [vmem:[%s166 + $0x120] sm:$0xff] %v1230
        %1495 = vst [vmem:[%s166 + $0x128] sm:$0xff] %v1232
        %1496 = vst [vmem:[%s166 + $0x130] sm:$0xff] %v1234
        %1497 = vst [vmem:[%s166 + $0x138] sm:$0xff] %v1236
        %1498 = vst [vmem:[%s166 + $0x140] sm:$0xff] %v1240
        %1499 = vst [vmem:[%s166 + $0x148] sm:$0xff] %v1242
        %1500 = vst [vmem:[%s166 + $0x150] sm:$0xff] %v1244
        %1501 = vst [vmem:[%s166 + $0x158] sm:$0xff] %v1246
        %1502 = vst [vmem:[%s166 + $0x160] sm:$0xff] %v1250
        %1503 = vst [vmem:[%s166 + $0x168] sm:$0xff] %v1252
        %1504 = vst [vmem:[%s166 + $0x170] sm:$0xff] %v1254
        %1505 = vst [vmem:[%s166 + $0x178] sm:$0xff] %v1256
        %1506 = vst [vmem:[%s166 + $0x180] sm:$0xff] %v1260
        %1507 = vst [vmem:[%s166 + $0x188] sm:$0xff] %v1262
        %1508 = vst [vmem:[%s166 + $0x190] sm:$0xff] %v1264
        %1509 = vst [vmem:[%s166 + $0x198] sm:$0xff] %v1266
        %1510 = vst [vmem:[%s166 + $0x1a0] sm:$0xff] %v1270
        %1511 = vst [vmem:[%s166 + $0x1a8] sm:$0xff] %v1272
        %1512 = vst [vmem:[%s166 + $0x1b0] sm:$0xff] %v1274
        %1513 = vst [vmem:[%s166 + $0x1b8] sm:$0xff] %v1276
        %1514 = vst [vmem:[%s166 + $0x1c0] sm:$0xff] %v1280
        %1515 = vst [vmem:[%s166 + $0x1c8] sm:$0xff] %v1282
        %1516 = vst [vmem:[%s166 + $0x1d0] sm:$0xff] %v1284
        %1517 = vst [vmem:[%s166 + $0x1d8] sm:$0xff] %v1286
        %1518 = vst [vmem:[%s166 + $0x1e0] sm:$0xff] %v1290
        %1519 = vst [vmem:[%s166 + $0x1e8] sm:$0xff] %v1292
        %1520 = vst [vmem:[%s166 + $0x1f0] sm:$0xff] %v1294
        %1521 = vst [vmem:[%s166 + $0x1f8] sm:$0xff] %v1296
        %1522 = vst [vmem:[%s166 + $0x200] sm:$0xff] %v1300
        %1523 = vst [vmem:[%s166 + $0x208] sm:$0xff] %v1302
        %1524 = vst [vmem:[%s166 + $0x210] sm:$0xff] %v1304
        %1525 = vst [vmem:[%s166 + $0x218] sm:$0xff] %v1306
        %1526 = vst [vmem:[%s166 + $0x220] sm:$0xff] %v1310
        %1527 = vst [vmem:[%s166 + $0x228] sm:$0xff] %v1312
        %1528 = vst [vmem:[%s166 + $0x230] sm:$0xff] %v1314
        %1529 = vst [vmem:[%s166 + $0x238] sm:$0xff] %v1316
        %1530 = vst [vmem:[%s166 + $0x240] sm:$0xff] %v1320
        %1531 = vst [vmem:[%s166 + $0x248] sm:$0xff] %v1322
        %1532 = vst [vmem:[%s166 + $0x250] sm:$0xff] %v1324
        %1533 = vst [vmem:[%s166 + $0x258] sm:$0xff] %v1326
        %1534 = vst [vmem:[%s166 + $0x260] sm:$0xff] %v1330
        %1535 = vst [vmem:[%s166 + $0x268] sm:$0xff] %v1332
        %1536 = vst [vmem:[%s166 + $0x270] sm:$0xff] %v1334
        %1537 = vst [vmem:[%s166 + $0x278] sm:$0xff] %v1336
        %1538 = vst [vmem:[%s166 + $0x280] sm:$0xff] %v1340
        %1539 = vst [vmem:[%s166 + $0x288] sm:$0xff] %v1342
        %1540 = vst [vmem:[%s166 + $0x290] sm:$0xff] %v1344
        %1541 = vst [vmem:[%s166 + $0x298] sm:$0xff] %v1346
        %1542 = vst [vmem:[%s166 + $0x2a0] sm:$0xff] %v1350
        %1543 = vst [vmem:[%s166 + $0x2a8] sm:$0xff] %v1352
        %1544 = vst [vmem:[%s166 + $0x2b0] sm:$0xff] %v1354
        %1545 = vst [vmem:[%s166 + $0x2b8] sm:$0xff] %v1356
        %1546 = vst [vmem:[%s166 + $0x2c0] sm:$0xff] %v1360
        %1547 = vst [vmem:[%s166 + $0x2c8] sm:$0xff] %v1362
        %1548 = vst [vmem:[%s166 + $0x2d0] sm:$0xff] %v1364
        %1549 = vst [vmem:[%s166 + $0x2d8] sm:$0xff] %v1366
        %1550 = vst [vmem:[%s166 + $0x2e0] sm:$0xff] %v1370
        %1551 = vst [vmem:[%s166 + $0x2e8] sm:$0xff] %v1372
        %1552 = vst [vmem:[%s166 + $0x2f0] sm:$0xff] %v1374
        %1553 = vst [vmem:[%s166 + $0x2f8] sm:$0xff] %v1376
        %1554 = vst [vmem:[%s166 + $0x300] sm:$0xff] %v1380
        %1555 = vst [vmem:[%s166 + $0x308] sm:$0xff] %v1382
        %1556 = vst [vmem:[%s166 + $0x310] sm:$0xff] %v1384
        %1557 = vst [vmem:[%s166 + $0x318] sm:$0xff] %v1386
        %1558 = vst [vmem:[%s166 + $0x320] sm:$0xff] %v1390
        %1559 = vst [vmem:[%s166 + $0x328] sm:$0xff] %v1392
        %1560 = vst [vmem:[%s166 + $0x330] sm:$0xff] %v1394
        %1561 = vst [vmem:[%s166 + $0x338] sm:$0xff] %v1396
        %1562 = vst [vmem:[%s166 + $0x340] sm:$0xff] %v1400
        %1563 = vst [vmem:[%s166 + $0x348] sm:$0xff] %v1402
        %1564 = vst [vmem:[%s166 + $0x350] sm:$0xff] %v1404
        %1565 = vst [vmem:[%s166 + $0x358] sm:$0xff] %v1406
        %1566 = vst [vmem:[%s166 + $0x360] sm:$0xff] %v1410
        %1567 = vst [vmem:[%s166 + $0x368] sm:$0xff] %v1412
        %1568 = vst [vmem:[%s166 + $0x370] sm:$0xff] %v1414
        %1569 = vst [vmem:[%s166 + $0x378] sm:$0xff] %v1416
        %1570 = vst [vmem:[%s166 + $0x380] sm:$0xff] %v1420
        %1571 = vst [vmem:[%s166 + $0x388] sm:$0xff] %v1422
        %1572 = vst [vmem:[%s166 + $0x390] sm:$0xff] %v1424
        %1573 = vst [vmem:[%s166 + $0x398] sm:$0xff] %v1426
        %1574 = vst [vmem:[%s166 + $0x3a0] sm:$0xff] %v1430
        %1575 = vst [vmem:[%s166 + $0x3a8] sm:$0xff] %v1432
        %1576 = vst [vmem:[%s166 + $0x3b0] sm:$0xff] %v1434
        %1577 = vst [vmem:[%s166 + $0x3b8] sm:$0xff] %v1436
        %1578 = vst [vmem:[%s166 + $0x3c0] sm:$0xff] %v1440
        %1579 = vst [vmem:[%s166 + $0x3c8] sm:$0xff] %v1442
        %1580 = vst [vmem:[%s166 + $0x3d0] sm:$0xff] %v1444
        %1581 = vst [vmem:[%s166 + $0x3d8] sm:$0xff] %v1446
        %1582 = vst [vmem:[%s166 + $0x3e0] sm:$0xff] %v1450
        %1583 = vst [vmem:[%s166 + $0x3e8] sm:$0xff] %v1452
        %1584 = vst [vmem:[%s166 + $0x3f0] sm:$0xff] %v1454
        %1585 = vst [vmem:[%s166 + $0x3f8] sm:$0xff] %v1456
        %s1586 = sand.u32 %s93, 1
        %s1587 = scalar_lea.sflag [#allocation3], %s1586
        %s1588 = sand.u32 %s93, 1
        %s1589 = smul.addr %s1588, 1024
        %s1590 = scalar_lea.vmem [#allocation2], %s1589
        // Predicated region
        $region33: #{net_forward.1} parent=31 // pred_check
          %p1591 = pneg %p103
        $region34: #{net_forward.1} parent=31 // pred_check_branch
          %1593 = sbr.rel (%p1591) target = $region36
        $region35: #{net_forward.1} parent=31 // pred_region
          %s1594 = smul.u32 64, %s17
          %s1596 = ssub.s32 16384, 16384
          %1597 = vsyncadd %s1587, %s1596
          %s1598 = smul.addr %s1594, 2
          %s1599 = smul.addr %s1598, 128
          %s1600 = scalar_lea.hbm %s3, %s1599
          %s1601 = sshll.u32 %s1590, 4
          %s1602 = int_to_ptr.vmem [resolvable:$true] %s1601
          %1607 = dma.vmem_to_hbm [thread:$0]  %s1602, 16384, %s1600, %s1587, 256, 256, 16
        $region36: #{net_forward.1} parent=31 // pred_fallthru
          _
      $region32: #{net_forward.1} parent=5 // pred_fallthru
        _
      %p1608 = scmp.le.s32.totalorder 2, %s12
      // Predicated region
      $region37: #{net_forward.1} parent=5 // pred_check
        %p1609 = pneg %p1608
      $region38: #{net_forward.1} parent=5 // pred_check_branch
        %1611 = sbr.rel (%p1609) target = $region40
      $region39: #{net_forward.1} parent=5 // pred_region
        %s1612 = ssub.s32 %s12, 2
        // Predicated region
        $region41: #{net_forward.1} parent=39 // pred_check
          %p1613 = pneg %p109
        $region42: #{net_forward.1} parent=39 // pred_check_branch
          %1615 = sbr.rel (%p1613) target = $region44
        $region43: #{net_forward.1} parent=39 // pred_region
          %s1616 = sand.u32 %s94, 1
          %s1617 = scalar_lea.sflag [#allocation3], %s1616
          %s1618 = sand.u32 %s94, 1
          %s1619 = smul.addr %s1618, 1024
          %s1620 = scalar_lea.vmem [#allocation2], %s1619
          %1621 = dma.done %s1617, 16384
        $region44: #{net_forward.1} parent=39 // pred_fallthru
          _
      $region40: #{net_forward.1} parent=5 // pred_fallthru
        _
    $region6: #{net_forward.1} parent=1 // loop_footer
      %s16 = sadd.s32 1, %s12
    $region7: #{net_forward.1} parent=1 // loop_footer_branch
      %11 = sbr.rel target = $region3
    $region8: #{net_forward.1} parent=1 // loop_exit
      _
    %1622 = vsyncpa [#allocation3], 1
    %s1623 = scalar_lea.sflag [#allocation3], 1
    %1624 = vsyncpa %s1623, 1

</llo_original>
